<compile_context>
chip_gen: v6e
topology: v6e:2x2x1
jax: 0.10.0
libtpu: 0.0.40
codegen_flags: <defaults>
</compile_context>

<pallas_src>
import jax
import jax.numpy as jnp
from jax.experimental import pallas as pl
from jax.experimental.pallas import tpu as pltpu


def rnn_seq_kernel(x_ref, h0_ref, w_in_ref, w_rec_ref, b_ref, out_ref, hN_ref):
    """One grid step == one RNN timestep.

    The carried hidden state lives in the resident final-hidden output block
    (constant index_map => stays in VMEM across all grid steps and is written
    back to HBM only once, after the last step).
    """
    t = pl.program_id(0)

    @pl.when(t == 0)
    def _():
        hN_ref[...] = h0_ref[...]

    h_pad = hN_ref.shape[1]

    x = x_ref[0].astype(jnp.bfloat16)                 # (B, I)      bf16 MXU operand
    h = hN_ref[...]                                   # (B, H_pad)  f32 carried state

    # Fused "i2h | i2o" matmul: y[:, :H_pad] -> new hidden, y[:, H_pad:] -> logits.
    # Padded logit columns carry bias == -1e30 (and zero weights), so they
    # vanish from the log-softmax without any in-kernel masking.
    y = (jnp.dot(x, w_in_ref[...], preferred_element_type=jnp.float32)
         + jnp.dot(h.astype(jnp.bfloat16), w_rec_ref[...],
                   preferred_element_type=jnp.float32)
         + b_ref[...])                                # (B, H_pad + O_pad) f32

    new_h = y[:, :h_pad]                              # padded hidden cols stay exactly 0
    logits = y[:, h_pad:]                             # (B, O_pad), padded cols ~ -1e30

    # Numerically stable log-softmax along the class axis (f32 throughout).
    m = jnp.max(logits, axis=-1, keepdims=True)
    shifted = logits - m
    lse = jnp.log(jnp.sum(jnp.exp(shifted), axis=-1, keepdims=True))
    out_ref[0] = (shifted - lse).astype(out_ref.dtype)

    # Carry the hidden state in the resident output block.
    hN_ref[...] = new_h


def _round_up(x, m):
    return ((x + m - 1) // m) * m


def rnn_sequence(xs, h0, w_h, b_h, w_o, b_o):
    """Run the RNN cell over a sequence in a single fused Pallas kernel.

    xs:  (T, B, I) inputs
    h0:  (B, H)    initial hidden
    w_h: (I+H, H), b_h: (1, H)   -- i2h  (weights stored transposed vs PyTorch)
    w_o: (I+H, O), b_o: (1, O)   -- i2o
    returns (outputs (T, B, O) log-probs, final hidden (B, H))
    """
    T, B, I = xs.shape
    H = w_h.shape[1]
    O = w_o.shape[1]
    H_pad = _round_up(max(H, 128), 128)   # lane-dense hidden slot
    O_pad = _round_up(max(O, 128), 128)   # lane-dense logits slot
    N = H_pad + O_pad

    b_h = jnp.reshape(b_h, (1, H))
    b_o = jnp.reshape(b_o, (1, O))

    def pad_cols(wh_part, wo_part):
        # [i2h block | i2o block], each column-padded to its lane-dense width.
        return jnp.concatenate([
            jnp.pad(wh_part, ((0, 0), (0, H_pad - H))),
            jnp.pad(wo_part, ((0, 0), (0, O_pad - O))),
        ], axis=1)

    # Split fused weight by rows: input rows vs recurrent rows (no in-kernel concat).
    w_in = pad_cols(w_h[:I], w_o[:I]).astype(jnp.bfloat16)               # (I, N)
    w_rec = jnp.pad(pad_cols(w_h[I:], w_o[I:]),
                    ((0, H_pad - H), (0, 0))).astype(jnp.bfloat16)       # (H_pad, N)

    # Bias: padded hidden columns get 0 (so carried padding stays exactly 0);
    # padded logit columns get -1e30 so they never contribute to the log-softmax.
    bias_h = jnp.pad(b_h, ((0, 0), (0, H_pad - H)))
    bias_o = jnp.pad(b_o, ((0, 0), (0, O_pad - O)), constant_values=-1e30)
    bias = jnp.concatenate([bias_h, bias_o], axis=1).astype(jnp.float32)  # (1, N)

    h0_p = jnp.pad(h0.astype(jnp.float32), ((0, 0), (0, H_pad - H)))      # (B, H_pad)

    out_pad, hN_pad = pl.pallas_call(
        rnn_seq_kernel,
        out_shape=(jax.ShapeDtypeStruct((T, B, O_pad), jnp.float32),
                   jax.ShapeDtypeStruct((B, H_pad), jnp.float32)),
        grid_spec=pltpu.PrefetchScalarGridSpec(
            num_scalar_prefetch=0,
            grid=(T,),
            in_specs=[
                pl.BlockSpec((1, B, I), lambda t: (t, 0, 0)),      # x_t streamed
                pl.BlockSpec((B, H_pad), lambda t: (0, 0)),        # h0 resident
                pl.BlockSpec((I, N), lambda t: (0, 0)),            # W_in resident
                pl.BlockSpec((H_pad, N), lambda t: (0, 0)),        # W_rec resident
                pl.BlockSpec((1, N), lambda t: (0, 0)),            # bias resident
            ],
            out_specs=(
                pl.BlockSpec((1, B, O_pad), lambda t: (t, 0, 0)),  # per-step logprobs
                pl.BlockSpec((B, H_pad), lambda t: (0, 0)),        # final hidden (carry)
            ),
        ),
        compiler_params=pltpu.CompilerParams(
            dimension_semantics=("arbitrary",),   # recurrence axis, not parallel
        ),
    )(xs, h0_p, w_in, w_rec, bias)

    return out_pad[..., :O], hN_pad[:, :H]


def rnn_cell(inp, hidden, w_h, b_h, w_o, b_o):
    """Single-step forward, identical to RNNModel.forward(input, hidden)."""
    outs, h_new = rnn_sequence(inp[None], hidden, w_h, b_h, w_o, b_o)
    return outs[0], h_new


def init_params(key, input_size, hidden_size, output_size):
    """Deterministic synthetic params, PyTorch-Linear-style uniform init."""
    k1, k2, k3, k4 = jax.random.split(key, 4)
    fan_in = input_size + hidden_size
    bound = 1.0 / jnp.sqrt(jnp.float32(fan_in))
    w_h = jax.random.uniform(k1, (fan_in, hidden_size), jnp.float32, -bound, bound)
    b_h = jax.random.uniform(k2, (1, hidden_size), jnp.float32, -bound, bound)
    w_o = jax.random.uniform(k3, (fan_in, output_size), jnp.float32, -bound, bound)
    b_o = jax.random.uniform(k4, (1, output_size), jnp.float32, -bound, bound)
    return w_h, b_h, w_o, b_o


if __name__ == "__main__":
    batch = 2
    input_size = 16
    hidden_size = 32
    output_size = 8
    seq_len = 8

    key = jax.random.PRNGKey(0)
    k_in, k_par = jax.random.split(key, 2)

    xs = jax.random.normal(k_in, (seq_len, batch, input_size), jnp.float32)
    h0 = jnp.zeros((batch, hidden_size), jnp.float32)   # initHidden()
    w_h, b_h, w_o, b_o = init_params(k_par, input_size, hidden_size, output_size)

    # Fused-sequence Pallas kernel.
    outs, hN = jax.jit(rnn_sequence)(xs, h0, w_h, b_h, w_o, b_o)
    jax.block_until_ready((outs, hN))

    # Pure-JAX f32 reference for the same recurrence.
    def ref_step(h, x):
        comb = jnp.concatenate([x, h], axis=1)
        h_new = comb @ w_h + b_h
        out = jax.nn.log_softmax(comb @ w_o + b_o, axis=-1)
        return h_new, out

    hN_ref, outs_ref = jax.lax.scan(ref_step, h0, xs)

    assert outs.shape == (seq_len, batch, output_size)
    assert hN.shape == (batch, hidden_size)
    assert bool(jnp.all(jnp.isfinite(outs)))
    # log-softmax rows sum to 1 in prob space
    assert jnp.allclose(jnp.sum(jnp.exp(outs), axis=-1), 1.0, atol=1e-4)
    # bf16 MXU operands with f32 accumulation -> loose tolerance vs f32 ref
    assert jnp.allclose(outs, outs_ref, atol=1e-1)
    assert jnp.allclose(hN, hN_ref, atol=1e-1)

    # Single-step path (the original module's forward signature).
    out1, h1 = jax.jit(rnn_cell)(xs[0], h0, w_h, b_h, w_o, b_o)
    jax.block_until_ready((out1, h1))
    assert out1.shape == (batch, output_size)
    assert h1.shape == (batch, hidden_size)
    assert jnp.allclose(out1, outs_ref[0], atol=1e-1)

    print("KERNEL_OK")
</pallas_src>

<mosaic_0001>
module attributes {stable_mosaic.version = 11 : i64} {
  func.func @rnn_seq_kernel(%arg0: i32, %arg1: memref<1x2x16xf32, #tpu.memory_space<vmem>>, %arg2: memref<2x128xf32, #tpu.memory_space<vmem>>, %arg3: memref<16x256xbf16, #tpu.memory_space<vmem>>, %arg4: memref<128x256xbf16, #tpu.memory_space<vmem>>, %arg5: memref<1x256xf32, #tpu.memory_space<vmem>>, %arg6: memref<1x2x128xf32, #tpu.memory_space<vmem>>, %arg7: memref<2x128xf32, #tpu.memory_space<vmem>>) attributes {dimension_semantics = [#tpu.dimension_semantics<arbitrary>], iteration_bounds = array<i64: 8>, scalar_prefetch = 0 : i64, scratch_operands = 0 : i64, tpu.core_type = #tpu.core_type<tc>, window_params = [{transform_indices = @transform_0, window_bounds = array<i64: 1, 2, 16>}, {pipeline_mode = #tpu.pipeline_mode<synchronous>, transform_indices = @transform_1, window_bounds = array<i64: 2, 128>}, {pipeline_mode = #tpu.pipeline_mode<synchronous>, transform_indices = @transform_2, window_bounds = array<i64: 16, 256>}, {pipeline_mode = #tpu.pipeline_mode<synchronous>, transform_indices = @transform_3, window_bounds = array<i64: 128, 256>}, {pipeline_mode = #tpu.pipeline_mode<synchronous>, transform_indices = @transform_4, window_bounds = array<i64: 1, 256>}, {transform_indices = @transform_5, window_bounds = array<i64: 1, 2, 128>}, {pipeline_mode = #tpu.pipeline_mode<synchronous>, transform_indices = @transform_6, window_bounds = array<i64: 2, 128>}]} {
    %c0_i32 = arith.constant 0 : i32
    %0 = arith.cmpi eq, %arg0, %c0_i32 : i32
    %1 = arith.extui %0 : i1 to i32
    %c0_i32_0 = arith.constant 0 : i32
    %2 = arith.cmpi ne, %1, %c0_i32_0 : i32
    scf.if %2 {
      %c0_19 = arith.constant 0 : index
      %c0_20 = arith.constant 0 : index
      %32 = vector.load %arg2[%c0_19, %c0_20] : memref<2x128xf32, #tpu.memory_space<vmem>>, vector<2x128xf32>
      %c0_21 = arith.constant 0 : index
      %c0_22 = arith.constant 0 : index
      %33 = vector.load %arg7[%c0_21, %c0_22] : memref<2x128xf32, #tpu.memory_space<vmem>>, vector<2x128xf32>
      tpu.vector_store %arg7[%c0_21, %c0_22], %32 {strides = array<i32>} : memref<2x128xf32, #tpu.memory_space<vmem>>, vector<2x128xf32>,
    } else {
    }
    %c0 = arith.constant 0 : index
    %c0_1 = arith.constant 0 : index
    %c0_2 = arith.constant 0 : index
    %3 = vector.load %arg1[%c0, %c0_1, %c0_2] : memref<1x2x16xf32, #tpu.memory_space<vmem>>, vector<1x2x16xf32>
    %4 = vector.shape_cast %3 : vector<1x2x16xf32> to vector<2x16xf32>
    %5 = arith.truncf %4 : vector<2x16xf32> to vector<2x16xbf16>
    %c0_3 = arith.constant 0 : index
    %c0_4 = arith.constant 0 : index
    %6 = vector.load %arg7[%c0_3, %c0_4] : memref<2x128xf32, #tpu.memory_space<vmem>>, vector<2x128xf32>
    %c0_5 = arith.constant 0 : index
    %c0_6 = arith.constant 0 : index
    %7 = vector.load %arg3[%c0_5, %c0_6] : memref<16x256xbf16, #tpu.memory_space<vmem>>, vector<16x256xbf16>
    %cst = arith.constant dense<0.000000e+00> : vector<2x256xf32>
    %8 = tpu.matmul %5, %7, %cst {dimension_numbers = #tpu.dot_dimension_numbers<[1], [0], [0], [1], [0, 0, 1, 1], [], []>} : vector<2x16xbf16>, vector<16x256xbf16>, vector<2x256xf32> -> vector<2x256xf32>
    %9 = arith.truncf %6 : vector<2x128xf32> to vector<2x128xbf16>
    %c0_7 = arith.constant 0 : index
    %c0_8 = arith.constant 0 : index
    %10 = vector.load %arg4[%c0_7, %c0_8] : memref<128x256xbf16, #tpu.memory_space<vmem>>, vector<128x256xbf16>
    %cst_9 = arith.constant dense<0.000000e+00> : vector<2x256xf32>
    %11 = tpu.matmul %9, %10, %cst_9 {dimension_numbers = #tpu.dot_dimension_numbers<[1], [0], [0], [1], [0, 0, 1, 1], [], []>} : vector<2x128xbf16>, vector<128x256xbf16>, vector<2x256xf32> -> vector<2x256xf32>
    %12 = arith.addf %8, %11 : vector<2x256xf32>
    %c0_10 = arith.constant 0 : index
    %c0_11 = arith.constant 0 : index
    %13 = vector.load %arg5[%c0_10, %c0_11] : memref<1x256xf32, #tpu.memory_space<vmem>>, vector<1x256xf32>
    %14 = vector.broadcast %13 : vector<1x256xf32> to vector<2x256xf32>
    %15 = arith.addf %12, %14 : vector<2x256xf32>
    %16 = vector.extract_strided_slice %15 {offsets = [0, 0], sizes = [2, 128], strides = [1, 1]} : vector<2x256xf32> to vector<2x128xf32>
    %17 = vector.extract_strided_slice %15 {offsets = [0, 128], sizes = [2, 128], strides = [1, 1]} : vector<2x256xf32> to vector<2x128xf32>
    %cst_12 = arith.constant dense<0xFF800000> : vector<2xf32>
    %18 = vector.multi_reduction <maximumf>, %17, %cst_12 [1] : vector<2x128xf32> to vector<2xf32>
    %19 = vector.shape_cast %18 : vector<2xf32> to vector<2x1xf32>
    %20 = vector.broadcast %19 : vector<2x1xf32> to vector<2x128xf32>
    %21 = arith.subf %17, %20 : vector<2x128xf32>
    %22 = math.exp %21 : vector<2x128xf32>
    %cst_13 = arith.constant dense<0.000000e+00> : vector<2xf32>
    %23 = vector.multi_reduction <add>, %22, %cst_13 [1] : vector<2x128xf32> to vector<2xf32>
    %24 = vector.shape_cast %23 : vector<2xf32> to vector<2x1xf32>
    %25 = math.log %24 : vector<2x1xf32>
    %26 = vector.broadcast %25 : vector<2x1xf32> to vector<2x128xf32>
    %27 = arith.subf %21, %26 : vector<2x128xf32>
    %c0_14 = arith.constant 0 : index
    %c0_15 = arith.constant 0 : index
    %c0_16 = arith.constant 0 : index
    %28 = vector.load %arg6[%c0_14, %c0_15, %c0_16] : memref<1x2x128xf32, #tpu.memory_space<vmem>>, vector<1x2x128xf32>
    %29 = vector.shape_cast %28 : vector<1x2x128xf32> to vector<2x128xf32>
    %30 = vector.shape_cast %27 : vector<2x128xf32> to vector<1x2x128xf32>
    tpu.vector_store %arg6[%c0_14, %c0_15, %c0_16], %30 {strides = array<i32>} : memref<1x2x128xf32, #tpu.memory_space<vmem>>, vector<1x2x128xf32>,
    %c0_17 = arith.constant 0 : index
    %c0_18 = arith.constant 0 : index
    %31 = vector.load %arg7[%c0_17, %c0_18] : memref<2x128xf32, #tpu.memory_space<vmem>>, vector<2x128xf32>
    tpu.vector_store %arg7[%c0_17, %c0_18], %16 {strides = array<i32>} : memref<2x128xf32, #tpu.memory_space<vmem>>, vector<2x128xf32>,
    return
  }
  func.func @transform_0(%arg0: i32) -> (i32, i32, i32) {
    %c0_i32 = arith.constant 0 : i32
    %c0_i32_0 = arith.constant 0 : i32
    %c0_i32_1 = arith.constant 0 : i32
    return %arg0, %c0_i32, %c0_i32_0 : i32, i32, i32
  }
  func.func @transform_1(%arg0: i32) -> (i32, i32) {
    %c0_i32 = arith.constant 0 : i32
    %c0_i32_0 = arith.constant 0 : i32
    %c0_i32_1 = arith.constant 0 : i32
    return %c0_i32, %c0_i32_0 : i32, i32
  }
  func.func @transform_2(%arg0: i32) -> (i32, i32) {
    %c0_i32 = arith.constant 0 : i32
    %c0_i32_0 = arith.constant 0 : i32
    %c0_i32_1 = arith.constant 0 : i32
    return %c0_i32, %c0_i32_0 : i32, i32
  }
  func.func @transform_3(%arg0: i32) -> (i32, i32) {
    %c0_i32 = arith.constant 0 : i32
    %c0_i32_0 = arith.constant 0 : i32
    %c0_i32_1 = arith.constant 0 : i32
    return %c0_i32, %c0_i32_0 : i32, i32
  }
  func.func @transform_4(%arg0: i32) -> (i32, i32) {
    %c0_i32 = arith.constant 0 : i32
    %c0_i32_0 = arith.constant 0 : i32
    %c0_i32_1 = arith.constant 0 : i32
    return %c0_i32, %c0_i32_0 : i32, i32
  }
  func.func @transform_5(%arg0: i32) -> (i32, i32, i32) {
    %c0_i32 = arith.constant 0 : i32
    %c0_i32_0 = arith.constant 0 : i32
    %c0_i32_1 = arith.constant 0 : i32
    return %arg0, %c0_i32, %c0_i32_0 : i32, i32, i32
  }
  func.func @transform_6(%arg0: i32) -> (i32, i32) {
    %c0_i32 = arith.constant 0 : i32
    %c0_i32_0 = arith.constant 0 : i32
    %c0_i32_1 = arith.constant 0 : i32
    return %c0_i32, %c0_i32_0 : i32, i32
  }
}

</mosaic_0001>

<llo_original>
// kernel: rnn_sequence.1
$region0: #{rnn_sequence.1}
  #allocation0 [shape = 'u32[]', space=smem, size = 0x4, offset = 0x4, fixed_abs, tag = 'smem constant byte address 0x4 - core index']
  #allocation1 [shape = 'u32[144,128]{1,0:T(1,128)}', space=vmem, size = 0x12000, scoped, tag = 'internal scratch']
  %s0 = inlined_call_operand.vmem [shape: f32[8,2,16], index: 0, kind: input, shape index: {}]
  %s1 = inlined_call_operand.vmem [shape: f32[2,128], index: 1, kind: input, shape index: {}]
  %s2 = inlined_call_operand.vmem [shape: bf16[16,256], index: 2, kind: input, shape index: {}]
  %s3 = inlined_call_operand.vmem [shape: bf16[128,256], index: 3, kind: input, shape index: {}]
  %s4 = inlined_call_operand.vmem [shape: f32[1,256], index: 4, kind: input, shape index: {}]
  %s5 = inlined_call_operand.hbm [shape: f32[8,2,128], index: 5, kind: output, shape index: {0}]
  %s6 = inlined_call_operand.hbm [shape: f32[2,128], index: 6, kind: output, shape index: {1}]
  %7 = xla_tuple %s5, %s6
  %s8 = sld [smem:[#allocation0]]
  $region65: #{rnn_sequence.1} parent=0
    _
  %s10 = ssub.s32 1, %s8
  %s11 = scalar_select 0, %s10, %s8
  $region1: #{rnn_sequence.1} parent=0
    #allocation2 [shape = 'u8[2048]{0}', space=vmem, size = 0x800, scoped, tag = 'output window, operand 0']
    #allocation3 [shape = 's32[2]{0}', space=sflag, size = 0x8, scoped, tag = 'scoped memory for rnn_sequence.1']
    #allocation4 [shape = 'u8[1024]{0}', space=vmem, size = 0x400, scoped, tag = 'output window, operand 1, single buffered']
    #allocation5 [shape = 's32[1]{0}', space=sflag, size = 0x4, scoped, tag = 'scoped memory for rnn_sequence.1']
    %12 = vsyncpa [#allocation3], 0
    %s13 = scalar_lea.sflag [#allocation3], 1
    %14 = vsyncpa %s13, 0
    %15 = vsyncpa [#allocation5], 0
    loop: start=0, step=1, limit=10
    $region2: #{rnn_sequence.1} parent=1 // loop_pre_header
      _
    $region3: #{rnn_sequence.1} parent=1 // loop_header
      %s17 = sphi 0, %s21
      %p18 = scmp.ge.s32.totalorder %s17, 10
      %s27 = sphi 0, %s29
      %s30 = sphi 0, %s27
      %s31 = sphi 0, %s30
      %s47 = sphi 0, %s31
      %s51 = sphi 0, %s51
      %s53 = sphi 0, %s51
      %s54 = sphi 0, %s53
      %s68 = sphi 0, %s54
      %s72 = sphi 0, %s72
      %s74 = sphi 0, %s72
      %s75 = sphi 0, %s74
      %s89 = sphi 0, %s75
      %s93 = sphi 0, %s93
      %s95 = sphi 0, %s93
      %s96 = sphi 0, %s95
      %s110 = sphi 0, %s96
      %s114 = sphi 0, %s114
      %s116 = sphi 0, %s114
      %s117 = sphi 0, %s116
      %s131 = sphi 0, %s117
      %s137 = sphi 0, %s139
      %s140 = sphi 0, %s137
      %s141 = sphi 0, %s140
      %s157 = sphi 0, %s141
      %s161 = sphi 0, %s161
      %s163 = sphi 0, %s161
      %s164 = sphi 0, %s163
      %s178 = sphi 0, %s164
    $region4: #{rnn_sequence.1} parent=1 // loop_header_branch
      %20 = sbr.rel (%p18) target = $region8
    $region5: #{rnn_sequence.1} parent=1 // loop_body
      %s22 = ssub.s32 %s17, 1
      %s23 = ssub.s32 %s17, 2
      %s24 = sadd.s32 %s17, 1
      %s25 = ssub.s32 %s17, %s24
      %p26 = scmp.eq.s32.totalorder %s25, 0
      %s28 = sadd.s32 %s27, 1
      %s29 = scalar_select %p26, %s27, %s28
      %p32 = pneg %p26
      %p33 = scmp.eq.s32.totalorder %s17, 7
      %p34 = por %p32, %p33
      %p35 = scmp.ne.s32.totalorder %s27, %s30
      %p36 = scmp.eq.s32.totalorder %s17, 0
      %p37 = por %p35, %p36
      %p38 = scmp.ne.s32.totalorder %s27, %s30
      %p39 = scmp.eq.s32.totalorder %s22, 7
      %p40 = por %p38, %p39
      %p41 = scmp.ne.s32.totalorder %s30, %s31
      %p42 = scmp.eq.s32.totalorder %s22, 0
      %p43 = por %p41, %p42
      %p44 = scmp.ne.s32.totalorder %s30, %s31
      %p45 = scmp.eq.s32.totalorder %s23, 7
      %p46 = por %p44, %p45
      %p48 = scmp.ne.s32.totalorder %s31, %s47
      %p49 = scmp.eq.s32.totalorder %s23, 0
      %p50 = por %p48, %p49
      %s52 = sadd.s32 %s51, 1
      %p55 = scmp.eq.s32.totalorder %s17, 7
      %p56 = scmp.ne.s32.totalorder %s51, %s53
      %p57 = scmp.eq.s32.totalorder %s17, 0
      %p58 = por %p56, %p57
      %p59 = scmp.ne.s32.totalorder %s51, %s53
      %p60 = scmp.eq.s32.totalorder %s22, 7
      %p61 = por %p59, %p60
      %p62 = scmp.ne.s32.totalorder %s53, %s54
      %p63 = scmp.eq.s32.totalorder %s22, 0
      %p64 = por %p62, %p63
      %p65 = scmp.ne.s32.totalorder %s53, %s54
      %p66 = scmp.eq.s32.totalorder %s23, 7
      %p67 = por %p65, %p66
      %p69 = scmp.ne.s32.totalorder %s54, %s68
      %p70 = scmp.eq.s32.totalorder %s23, 0
      %p71 = por %p69, %p70
      %s73 = sadd.s32 %s72, 1
      %p76 = scmp.eq.s32.totalorder %s17, 7
      %p77 = scmp.ne.s32.totalorder %s72, %s74
      %p78 = scmp.eq.s32.totalorder %s17, 0
      %p79 = por %p77, %p78
      %p80 = scmp.ne.s32.totalorder %s72, %s74
      %p81 = scmp.eq.s32.totalorder %s22, 7
      %p82 = por %p80, %p81
      %p83 = scmp.ne.s32.totalorder %s74, %s75
      %p84 = scmp.eq.s32.totalorder %s22, 0
      %p85 = por %p83, %p84
      %p86 = scmp.ne.s32.totalorder %s74, %s75
      %p87 = scmp.eq.s32.totalorder %s23, 7
      %p88 = por %p86, %p87
      %p90 = scmp.ne.s32.totalorder %s75, %s89
      %p91 = scmp.eq.s32.totalorder %s23, 0
      %p92 = por %p90, %p91
      %s94 = sadd.s32 %s93, 1
      %p97 = scmp.eq.s32.totalorder %s17, 7
      %p98 = scmp.ne.s32.totalorder %s93, %s95
      %p99 = scmp.eq.s32.totalorder %s17, 0
      %p100 = por %p98, %p99
      %p101 = scmp.ne.s32.totalorder %s93, %s95
      %p102 = scmp.eq.s32.totalorder %s22, 7
      %p103 = por %p101, %p102
      %p104 = scmp.ne.s32.totalorder %s95, %s96
      %p105 = scmp.eq.s32.totalorder %s22, 0
      %p106 = por %p104, %p105
      %p107 = scmp.ne.s32.totalorder %s95, %s96
      %p108 = scmp.eq.s32.totalorder %s23, 7
      %p109 = por %p107, %p108
      %p111 = scmp.ne.s32.totalorder %s96, %s110
      %p112 = scmp.eq.s32.totalorder %s23, 0
      %p113 = por %p111, %p112
      %s115 = sadd.s32 %s114, 1
      %p118 = scmp.eq.s32.totalorder %s17, 7
      %p119 = scmp.ne.s32.totalorder %s114, %s116
      %p120 = scmp.eq.s32.totalorder %s17, 0
      %p121 = por %p119, %p120
      %p122 = scmp.ne.s32.totalorder %s114, %s116
      %p123 = scmp.eq.s32.totalorder %s22, 7
      %p124 = por %p122, %p123
      %p125 = scmp.ne.s32.totalorder %s116, %s117
      %p126 = scmp.eq.s32.totalorder %s22, 0
      %p127 = por %p125, %p126
      %p128 = scmp.ne.s32.totalorder %s116, %s117
      %p129 = scmp.eq.s32.totalorder %s23, 7
      %p130 = por %p128, %p129
      %p132 = scmp.ne.s32.totalorder %s117, %s131
      %p133 = scmp.eq.s32.totalorder %s23, 0
      %p134 = por %p132, %p133
      %s135 = ssub.s32 %s17, %s24
      %p136 = scmp.eq.s32.totalorder %s135, 0
      %s138 = sadd.s32 %s137, 1
      %s139 = scalar_select %p136, %s137, %s138
      %p142 = pneg %p136
      %p143 = scmp.eq.s32.totalorder %s17, 7
      %p144 = por %p142, %p143
      %p145 = scmp.ne.s32.totalorder %s137, %s140
      %p146 = scmp.eq.s32.totalorder %s17, 0
      %p147 = por %p145, %p146
      %p148 = scmp.ne.s32.totalorder %s137, %s140
      %p149 = scmp.eq.s32.totalorder %s22, 7
      %p150 = por %p148, %p149
      %p151 = scmp.ne.s32.totalorder %s140, %s141
      %p152 = scmp.eq.s32.totalorder %s22, 0
      %p153 = por %p151, %p152
      %p154 = scmp.ne.s32.totalorder %s140, %s141
      %p155 = scmp.eq.s32.totalorder %s23, 7
      %p156 = por %p154, %p155
      %p158 = scmp.ne.s32.totalorder %s141, %s157
      %p159 = scmp.eq.s32.totalorder %s23, 0
      %p160 = por %p158, %p159
      %s162 = sadd.s32 %s161, 1
      %p165 = scmp.eq.s32.totalorder %s17, 7
      %p166 = scmp.ne.s32.totalorder %s161, %s163
      %p167 = scmp.eq.s32.totalorder %s17, 0
      %p168 = por %p166, %p167
      %p169 = scmp.ne.s32.totalorder %s161, %s163
      %p170 = scmp.eq.s32.totalorder %s22, 7
      %p171 = por %p169, %p170
      %p172 = scmp.ne.s32.totalorder %s163, %s164
      %p173 = scmp.eq.s32.totalorder %s22, 0
      %p174 = por %p172, %p173
      %p175 = scmp.ne.s32.totalorder %s163, %s164
      %p176 = scmp.eq.s32.totalorder %s23, 7
      %p177 = por %p175, %p176
      %p179 = scmp.ne.s32.totalorder %s164, %s178
      %p180 = scmp.eq.s32.totalorder %s23, 0
      %p181 = por %p179, %p180
      %p182 = scmp.le.s32.totalorder 1, %s17
      %p183 = scmp.lt.s32.totalorder %s17, 9
      %p184 = pnand %p182, %p183
      %p185 = pneg %p184
      // Predicated region
      $region9: #{rnn_sequence.1} parent=5 // pred_check
        _
      $region10: #{rnn_sequence.1} parent=5 // pred_check_branch
        %187 = sbr.rel (%p184) target = $region12
      $region11: #{rnn_sequence.1} parent=5 // pred_region
        %s188 = ssub.s32 %s17, 1
        // Predicated region
        $region13: #{rnn_sequence.1} parent=11 // pred_check
          %p189 = pneg %p64
        $region14: #{rnn_sequence.1} parent=11 // pred_check_branch
          %191 = sbr.rel (%p189) target = $region16
        $region15: #{rnn_sequence.1} parent=11 // pred_region
          _
        $region16: #{rnn_sequence.1} parent=11 // pred_fallthru
          _
        // Predicated region
        $region17: #{rnn_sequence.1} parent=11 // pred_check
          %p192 = pneg %p85
        $region18: #{rnn_sequence.1} parent=11 // pred_check_branch
          %194 = sbr.rel (%p192) target = $region20
        $region19: #{rnn_sequence.1} parent=11 // pred_region
          _
        $region20: #{rnn_sequence.1} parent=11 // pred_fallthru
          _
        // Predicated region
        $region21: #{rnn_sequence.1} parent=11 // pred_check
          %p195 = pneg %p106
        $region22: #{rnn_sequence.1} parent=11 // pred_check_branch
          %197 = sbr.rel (%p195) target = $region24
        $region23: #{rnn_sequence.1} parent=11 // pred_region
          _
        $region24: #{rnn_sequence.1} parent=11 // pred_fallthru
          _
        // Predicated region
        $region25: #{rnn_sequence.1} parent=11 // pred_check
          %p198 = pneg %p127
        $region26: #{rnn_sequence.1} parent=11 // pred_check_branch
          %200 = sbr.rel (%p198) target = $region28
        $region27: #{rnn_sequence.1} parent=11 // pred_region
          _
        $region28: #{rnn_sequence.1} parent=11 // pred_fallthru
          _
      $region12: #{rnn_sequence.1} parent=5 // pred_fallthru
        _
      %p201 = scmp.lt.s32.totalorder %s17, 8
      // Predicated region
      $region29: #{rnn_sequence.1} parent=5 // pred_check
        %p202 = pneg %p201
      $region30: #{rnn_sequence.1} parent=5 // pred_check_branch
        %204 = sbr.rel (%p202) target = $region32
      $region31: #{rnn_sequence.1} parent=5 // pred_region
        // Predicated region
        $region33: #{rnn_sequence.1} parent=31 // pred_check
          %p205 = pneg %p37
        $region34: #{rnn_sequence.1} parent=31 // pred_check_branch
          %207 = sbr.rel (%p205) target = $region36
        $region35: #{rnn_sequence.1} parent=31 // pred_region
          %p208 = scmp.lt.s32.totalorder %s17, 7
          %s209 = scalar_select %p208, %s17, 7
          %s210 = smul.addr %s209, 2
          %s211 = scalar_lea.vmem %s0, %s210
        $region36: #{rnn_sequence.1} parent=31 // pred_fallthru
          _
      $region32: #{rnn_sequence.1} parent=5 // pred_fallthru
        _
      %p212 = scmp.le.s32.totalorder 1, %s17
      %p213 = scmp.lt.s32.totalorder %s17, 9
      %p214 = pnand %p212, %p213
      %p215 = pneg %p214
      // Predicated region
      $region37: #{rnn_sequence.1} parent=5 // pred_check
        _
      $region38: #{rnn_sequence.1} parent=5 // pred_check_branch
        %217 = sbr.rel (%p214) target = $region40
      $region39: #{rnn_sequence.1} parent=5 // pred_region
        %s218 = ssub.s32 %s17, 1
        %p219 = scmp.lt.s32.totalorder %s22, 7
        %s220 = scalar_select %p219, %s22, 7
        %s221 = smul.addr %s220, 2
        %s222 = scalar_lea.vmem %s0, %s221
        %p223 = pneg %p43
        %p224 = pneg %p40
        %p225 = pneg %p64
        %p226 = pneg %p61
        %p227 = pneg %p85
        %p228 = pneg %p82
        %p229 = pneg %p106
        %p230 = pneg %p103
        %p231 = pneg %p127
        %p232 = pneg %p124
        %p233 = pneg %p153
        %p234 = pneg %p150
        %s235 = sand.u32 %s140, 1
        %s236 = scalar_lea.sflag [#allocation3], %s235
        %s237 = sand.u32 %s140, 1
        %s238 = smul.addr %s237, 2
        %s239 = scalar_lea.vmem [#allocation2], %s238
        %p240 = pneg %p174
        %p241 = pneg %p171
        %p242 = scmp.lt.s32.totalorder %s22, 7
        %s243 = scalar_select %p242, %s22, 7
        %s244 = smul.addr %s243, 2
        %s245 = scalar_lea.vmem %s0, %s244
        %p247 = scmp.eq.s32.totalorder %s22, 0
        // Predicated region
        $region41: #{rnn_sequence.1} parent=39 // pred_check
          %p248 = pneg %p247
        $region42: #{rnn_sequence.1} parent=39 // pred_check_branch
          %250 = sbr.rel (%p248) target = $region44
        $region43: #{rnn_sequence.1} parent=39 // pred_region
          %v251 = vld [vmem:[%s1] sm:$0x3]
          %252 = vst [vmem:[#allocation4] sm:$0x3] %v251
        $region44: #{rnn_sequence.1} parent=39 // pred_fallthru
          _
        %v253 = vld [vmem:[%s245] sm:$0x3]
        %v254 = vpack.c.bf16 %v253, %v253
        %v255 = vld [vmem:[#allocation4] sm:$0x3]
        %v256 = vld [vmem:[%s2] sm:$0xff]
        %v257 = vld [vmem:[%s2 + $0x8] sm:$0xff]
        %v258 = vpack.c.bf16 %v255, %v255
        %v259 = vld [vmem:[%s3] sm:$0xff]
        %v260 = vld [vmem:[%s3 + $0x8] sm:$0xff]
        %v261 = vld [vmem:[%s3 + $0x10] sm:$0xff]
        %v262 = vld [vmem:[%s3 + $0x18] sm:$0xff]
        %v263 = vld [vmem:[%s3 + $0x20] sm:$0xff]
        %v264 = vld [vmem:[%s3 + $0x28] sm:$0xff]
        %v265 = vld [vmem:[%s3 + $0x30] sm:$0xff]
        %v266 = vld [vmem:[%s3 + $0x38] sm:$0xff]
        %v267 = vld [vmem:[%s3 + $0x40] sm:$0xff]
        %v268 = vld [vmem:[%s3 + $0x48] sm:$0xff]
        %v269 = vld [vmem:[%s3 + $0x50] sm:$0xff]
        %v270 = vld [vmem:[%s3 + $0x58] sm:$0xff]
        %v271 = vld [vmem:[%s3 + $0x60] sm:$0xff]
        %v272 = vld [vmem:[%s3 + $0x68] sm:$0xff]
        %v273 = vld [vmem:[%s3 + $0x70] sm:$0xff]
        %v274 = vld [vmem:[%s3 + $0x78] sm:$0xff]
        %v291 = vunpack.c.l.b16 %v259
        %v292 = vunpack.c.h.b16 %v259
        %v293 = vunpack.c.l.b16 %v260
        %v294 = vunpack.c.h.b16 %v260
        %v295 = vunpack.c.l.b16 %v261
        %v296 = vunpack.c.h.b16 %v261
        %v297 = vunpack.c.l.b16 %v262
        %v298 = vunpack.c.h.b16 %v262
        %v299 = vunpack.c.l.b16 %v263
        %v300 = vunpack.c.h.b16 %v263
        %v301 = vunpack.c.l.b16 %v264
        %v302 = vunpack.c.h.b16 %v264
        %v303 = vunpack.c.l.b16 %v265
        %v304 = vunpack.c.h.b16 %v265
        %v305 = vunpack.c.l.b16 %v266
        %v306 = vunpack.c.h.b16 %v266
        %v307 = vunpack.c.l.b16 %v267
        %v308 = vunpack.c.h.b16 %v267
        %v309 = vunpack.c.l.b16 %v268
        %v310 = vunpack.c.h.b16 %v268
        %v311 = vunpack.c.l.b16 %v269
        %v312 = vunpack.c.h.b16 %v269
        %v313 = vunpack.c.l.b16 %v270
        %v314 = vunpack.c.h.b16 %v270
        %v315 = vunpack.c.l.b16 %v271
        %v316 = vunpack.c.h.b16 %v271
        %v317 = vunpack.c.l.b16 %v272
        %v318 = vunpack.c.h.b16 %v272
        %v319 = vunpack.c.l.b16 %v273
        %v320 = vunpack.c.h.b16 %v273
        %v321 = vunpack.c.l.b16 %v274
        %v322 = vunpack.c.h.b16 %v274
        %v323 = vpack.c.b16 %v293, %v291
        %v324 = vpack.c.b16 %v294, %v292
        %v325 = vpack.c.b16 %v297, %v295
        %v326 = vpack.c.b16 %v298, %v296
        %v327 = vpack.c.b16 %v301, %v299
        %v328 = vpack.c.b16 %v302, %v300
        %v329 = vpack.c.b16 %v305, %v303
        %v330 = vpack.c.b16 %v306, %v304
        %v331 = vpack.c.b16 %v309, %v307
        %v332 = vpack.c.b16 %v310, %v308
        %v333 = vpack.c.b16 %v313, %v311
        %v334 = vpack.c.b16 %v314, %v312
        %v335 = vpack.c.b16 %v317, %v315
        %v336 = vpack.c.b16 %v318, %v316
        %v337 = vpack.c.b16 %v321, %v319
        %v338 = vpack.c.b16 %v322, %v320
        %355 = vmatprep.subr.bf16.mxu0 %v338
        %356 = vmatpush1.bf16.msra.mxu0 %v337
        %357 = vmatprep.subr.bf16.mxu0 %v336
        %358 = vmatpush1.bf16.msra.mxu0 %v335
        %359 = vmatprep.subr.bf16.mxu0 %v334
        %360 = vmatpush1.bf16.msra.mxu0 %v333
        %361 = vmatprep.subr.bf16.mxu0 %v332
        %362 = vmatpush1.bf16.msra.mxu0 %v331
        %363 = vmatprep.subr.bf16.mxu0 %v330
        %364 = vmatpush1.bf16.msra.mxu0 %v329
        %365 = vmatprep.subr.bf16.mxu0 %v328
        %366 = vmatpush1.bf16.msra.mxu0 %v327
        %367 = vmatprep.subr.bf16.mxu0 %v326
        %368 = vmatpush1.bf16.msra.mxu0 %v325
        %369 = vmatprep.subr.bf16.mxu0 %v324
        %370 = vmatpush1.bf16.msra.mxu0 %v323
        %371 = vmatprep.subr.bf16.mxu0 0
        %372 = vmatpush2.bf16.msra.mxu0 0
        %373 = vmatprep.subr.bf16.mxu0 0
        %374 = vmatpush2.bf16.msra.mxu0 0
        %375 = vmatprep.subr.bf16.mxu0 0
        %376 = vmatpush2.bf16.msra.mxu0 0
        %377 = vmatprep.subr.bf16.mxu0 0
        %378 = vmatpush2.bf16.msra.mxu0 0
        %379 = vmatprep.subr.bf16.mxu0 0
        %380 = vmatpush2.bf16.msra.mxu0 0
        %381 = vmatprep.subr.bf16.mxu0 0
        %382 = vmatpush2.bf16.msra.mxu0 0
        %383 = vmatprep.subr.bf16.mxu0 0
        %384 = vmatpush2.bf16.msra.mxu0 0
        %385 = vmatprep.subr.bf16.mxu0 0
        %386 = vmatpush2.bf16.msra.mxu0 0
        %387 = vmatprep.mubr.bf16.mxu0 0
        %388 = vmatmul.mubr.bf16.gmra.mxu0 %v258
        %v389 = vpop.f32.mrf.mxu0
        %v390 = vadd.f32 0.0, %v389
        %v391 = vpop.f32.mrf.mxu0
        %v392 = vadd.f32 0.0, %v391
        %v393 = vpop.f32.mrf.mxu0
        %v394 = vpop.f32.mrf.mxu0
        %395 = vdwg.mxu0
        %v398 = vunpack.c.l.b16 %v256
        %v399 = vunpack.c.h.b16 %v256
        %v400 = vunpack.c.l.b16 %v257
        %v401 = vunpack.c.h.b16 %v257
        %v402 = vpack.c.b16 %v400, %v398
        %v403 = vpack.c.b16 %v401, %v399
        %vm406 = vcmask 130048
        %v408 = vsel %vm406, %v254, 0
        %410 = vmatprep.subr.bf16.mxu0 0
        %411 = vmatpush1.bf16.msra.mxu0 0
        %412 = vmatprep.subr.bf16.mxu0 0
        %413 = vmatpush1.bf16.msra.mxu0 0
        %414 = vmatprep.subr.bf16.mxu0 0
        %415 = vmatpush1.bf16.msra.mxu0 0
        %416 = vmatprep.subr.bf16.mxu0 0
        %417 = vmatpush1.bf16.msra.mxu0 0
        %418 = vmatprep.subr.bf16.mxu0 0
        %419 = vmatpush1.bf16.msra.mxu0 0
        %420 = vmatprep.subr.bf16.mxu0 0
        %421 = vmatpush1.bf16.msra.mxu0 0
        %422 = vmatprep.subr.bf16.mxu0 0
        %423 = vmatpush1.bf16.msra.mxu0 0
        %424 = vmatprep.subr.bf16.mxu0 %v403
        %425 = vmatpush1.bf16.msra.mxu0 %v402
        %426 = vmatprep.subr.bf16.mxu0 0
        %427 = vmatpush2.bf16.msra.mxu0 0
        %428 = vmatprep.subr.bf16.mxu0 0
        %429 = vmatpush2.bf16.msra.mxu0 0
        %430 = vmatprep.subr.bf16.mxu0 0
        %431 = vmatpush2.bf16.msra.mxu0 0
        %432 = vmatprep.subr.bf16.mxu0 0
        %433 = vmatpush2.bf16.msra.mxu0 0
        %434 = vmatprep.subr.bf16.mxu0 0
        %435 = vmatpush2.bf16.msra.mxu0 0
        %436 = vmatprep.subr.bf16.mxu0 0
        %437 = vmatpush2.bf16.msra.mxu0 0
        %438 = vmatprep.subr.bf16.mxu0 0
        %439 = vmatpush2.bf16.msra.mxu0 0
        %440 = vmatprep.subr.bf16.mxu0 0
        %441 = vmatpush2.bf16.msra.mxu0 0
        %442 = vmatprep.mubr.bf16.mxu0 0
        %443 = vmatmul.mubr.bf16.gmra.mxu0 %v408
        %v444 = vpop.f32.mrf.mxu0
        %v445 = vadd.f32 %v390, %v444
        %v446 = vpop.f32.mrf.mxu0
        %v447 = vadd.f32 %v392, %v446
        %v448 = vpop.f32.mrf.mxu0
        %v449 = vpop.f32.mrf.mxu0
        %450 = vdwg.mxu0
        %v451 = vld [vmem:[%s4] sm:$0x3]
        %v453 = vlaneseq
        %v454 = vshrl.u32 %v453, 7
        %v455 = vsub.s32 0, %v454
        %v456 = vrot.slane %v451, %v455
        %v457 = vlaneseq
        %v458 = vshrl.u32 %v457, 7
        %v459 = vsub.s32 1, %v458
        %v460 = vrot.slane %v451, %v459
        %v463 = vadd.f32 %v445, %v456
        %v464 = vadd.f32 %v447, %v460
        %vm465 = vcmask 1041408
        %v466 = vsel %vm465, %v464, -inf
        %467 = vmax.xlane.f32.xlu0 %v466
        %v468 = vpop.xlane.xlu0 %467
        %v469 = vsub.f32 %v464, %v468
        %v470 = vmul.f32 %v469, 1.442695
        %v471 = vpow.pop %v470
        %v472 = vsel %vm465, %v471, 0.0
        %473 = vadd.xlane.f32.xlu0 %v472
        %v474 = vpop.xlane.xlu0 %473
        %v475 = vlog2.pop %v474
        %v476 = vmul.f32 %v475, 0.6931472
        %v477 = vsub.f32 %v469, %v476
        %478 = vst [vmem:[%s239] sm:$0x3] %v477
        %479 = vst [vmem:[#allocation4] sm:$0x3] %v463
        %s480 = sand.u32 %s140, 1
        %s481 = scalar_lea.sflag [#allocation3], %s480
        %s482 = sand.u32 %s140, 1
        %s483 = smul.addr %s482, 2
        %s484 = scalar_lea.vmem [#allocation2], %s483
        // Predicated region
        $region45: #{rnn_sequence.1} parent=39 // pred_check
          %p485 = pneg %p150
        $region46: #{rnn_sequence.1} parent=39 // pred_check_branch
          %487 = sbr.rel (%p485) target = $region48
        $region47: #{rnn_sequence.1} parent=39 // pred_region
          %s489 = ssub.s32 32, 32
          %490 = vsyncadd %s481, %s489
          %s491 = smul.addr %s22, 32
          %s492 = scalar_lea.hbm %s5, %s491
          %s494 = sshll.u32 %s484, 4
          %s495 = int_to_ptr.vmem [resolvable:$true] %s494
          %497 = dma.vmem_to_hbm [thread:$0]  %s495, 32, %s492, %s481
        $region48: #{rnn_sequence.1} parent=39 // pred_fallthru
          _
        // Predicated region
        $region49: #{rnn_sequence.1} parent=39 // pred_check
          %p498 = pneg %p171
        $region50: #{rnn_sequence.1} parent=39 // pred_check_branch
          %500 = sbr.rel (%p498) target = $region52
        $region51: #{rnn_sequence.1} parent=39 // pred_region
          %s502 = ssub.s32 32, 32
          %503 = vsyncadd [#allocation5], %s502
          %s505 = sshll.u32 [#allocation4], 4
          %s506 = int_to_ptr.vmem [resolvable:$true] %s505
          %508 = dma.vmem_to_hbm [thread:$0]  %s506, 32, %s6, [#allocation5]
        $region52: #{rnn_sequence.1} parent=39 // pred_fallthru
          _
        // Predicated region
        $region53: #{rnn_sequence.1} parent=39 // pred_check
          %p509 = pneg %p171
        $region54: #{rnn_sequence.1} parent=39 // pred_check_branch
          %511 = sbr.rel (%p509) target = $region56
        $region55: #{rnn_sequence.1} parent=39 // pred_region
          %512 = dma.done [#allocation5], 32
        $region56: #{rnn_sequence.1} parent=39 // pred_fallthru
          _
      $region40: #{rnn_sequence.1} parent=5 // pred_fallthru
        _
      %p513 = scmp.le.s32.totalorder 2, %s17
      // Predicated region
      $region57: #{rnn_sequence.1} parent=5 // pred_check
        %p514 = pneg %p513
      $region58: #{rnn_sequence.1} parent=5 // pred_check_branch
        %516 = sbr.rel (%p514) target = $region60
      $region59: #{rnn_sequence.1} parent=5 // pred_region
        %s517 = ssub.s32 %s17, 2
        // Predicated region
        $region61: #{rnn_sequence.1} parent=59 // pred_check
          %p518 = pneg %p156
        $region62: #{rnn_sequence.1} parent=59 // pred_check_branch
          %520 = sbr.rel (%p518) target = $region64
        $region63: #{rnn_sequence.1} parent=59 // pred_region
          %s521 = sand.u32 %s141, 1
          %s522 = scalar_lea.sflag [#allocation3], %s521
          %s523 = sand.u32 %s141, 1
          %s524 = smul.addr %s523, 2
          %s525 = scalar_lea.vmem [#allocation2], %s524
          %526 = dma.done %s522, 32
        $region64: #{rnn_sequence.1} parent=59 // pred_fallthru
          _
      $region60: #{rnn_sequence.1} parent=5 // pred_fallthru
        _
    $region6: #{rnn_sequence.1} parent=1 // loop_footer
      %s21 = sadd.s32 1, %s17
    $region7: #{rnn_sequence.1} parent=1 // loop_footer_branch
      %16 = sbr.rel target = $region3
    $region8: #{rnn_sequence.1} parent=1 // loop_exit
      _
    %527 = vsyncpa [#allocation3], 1
    %s528 = scalar_lea.sflag [#allocation3], 1
    %529 = vsyncpa %s528, 1
    %530 = vsyncpa [#allocation5], 1

</llo_original>
